<compile_context>
chip_gen: v7x
topology: tpu7x:2x2x1
jax: 0.10.0
libtpu: 0.0.40
codegen_flags: <defaults>
</compile_context>

<pallas_src>
import functools

import numpy as np
import jax
import jax.numpy as jnp
from jax import lax
from jax.experimental import pallas as pl
from jax.experimental.pallas import tpu as pltpu


# ----------------------------- helpers ---------------------------------------

def _pair(v):
    if isinstance(v, (tuple, list)):
        return int(v[0]), int(v[1])
    return int(v), int(v)


def _round_up(x, m):
    return ((x + m - 1) // m) * m


# ----------------------------- Pallas kernel ---------------------------------

def _conv_bn_kernel(w_ref, scale_ref, bias_ref, x_ref, o_ref, xcol_ref, *,
                    tap_offsets, c_in_p, p_lanes):
    # w_ref:     (co_tile, K)            folded-tap weight matrix, K = kh*kw*C_in_p
    # scale_ref: (co_tile, 1)            folded inference-BN scale
    # bias_ref:  (co_tile, 1)            folded bias (conv bias + BN shift)
    # x_ref:     (1, 1, C_in_p, tile_len) flattened (rows_in x W_lanes) haloed tile
    # o_ref:     (1, co_tile, P)         flattened output rows of this tile
    # xcol_ref:  (K, P)                  VMEM im2col scratch
    #
    # Gather the kh*kw shifted views of the VMEM-resident tile into the im2col slab.
    # Row offsets i*dh*W_lanes are lane-aligned (W_lanes % 128 == 0); the small
    # intra-row offsets j*dw are cheap lane shifts.
    for t, off in enumerate(tap_offsets):                      # static, unrolled
        xcol_ref[pl.ds(t * c_in_p, c_in_p), :] = x_ref[0, 0, :, pl.ds(off, p_lanes)]
    # One big-K MXU matmul per tile (instead of kh*kw tiny-K matmuls); f32 accumulate.
    acc = jnp.dot(w_ref[...], xcol_ref[...], preferred_element_type=jnp.float32)
    # Fused inference-BatchNorm (+conv bias) epilogue.
    o_ref[0] = (acc * scale_ref[...] + bias_ref[...]).astype(o_ref.dtype)


# ----------------------------- wrapper ----------------------------------------

def conv2d_batchnorm(x, weight, conv_bias=None, *, stride=1, padding=0,
                     dilation=1, bn_params=None, eps=1e-5,
                     compute_dtype=jnp.bfloat16, rows_per_tile=None):
    """x: (N, C_in, H, W), weight: (C_out, C_in, kh, kw).
    bn_params = (gamma, beta, running_mean, running_var) or None (with_bn=False).
    Returns (N, C_out, H_out, W_out) f32, matching the PyTorch module in eval mode.
    compute_dtype: MXU operand dtype (bf16 default for v6e/v7x; pass f32 for tight
    numerical agreement)."""
    N, C_in, H, W = x.shape
    C_out, C_in_w, kh, kw = weight.shape
    assert C_in_w == C_in
    sh, sw = _pair(stride)
    ph, pw = _pair(padding)
    dh, dw = _pair(dilation)

    # stride-1 dense output geometry (stride handled by a cheap subsample below).
    H1 = H + 2 * ph - dh * (kh - 1)
    W1 = W + 2 * pw - dw * (kw - 1)
    assert H1 > 0 and W1 > 0, "kernel larger than padded input"

    # ---- fold conv bias + inference-mode BN into per-channel scale & bias -------
    if bn_params is not None:
        gamma, beta, r_mean, r_var = bn_params
        scale = gamma.astype(jnp.float32) / jnp.sqrt(r_var.astype(jnp.float32) + eps)
        bias = beta.astype(jnp.float32) - r_mean.astype(jnp.float32) * scale
    else:
        scale = jnp.ones((C_out,), jnp.float32)
        bias = jnp.zeros((C_out,), jnp.float32)
    if conv_bias is not None:
        bias = bias + conv_bias.astype(jnp.float32) * scale

    # ---- padded geometry / tiling ------------------------------------------------
    C_in_p = _round_up(C_in, 8)                 # aligned im2col row blocks, real zeros
    C_out_p = _round_up(C_out, 8)
    if C_out_p > 256:                           # tile C_out for wide layers
        C_out_p = _round_up(C_out_p, 128)
        co_tile = 128
    else:
        co_tile = C_out_p
    n_co = C_out_p // co_tile

    W_lanes = _round_up(W1, 128)                # lane-dense row width
    if W + 2 * pw > W_lanes:                    # keep every valid tap read in-row
        W_lanes = _round_up(W + 2 * pw, 128)

    K = kh * kw * C_in_p
    if rows_per_tile is None:
        budget = 4 * 1024 * 1024                # cap im2col scratch per tile (~4 MiB)
        R = max(1, min(8, H1, budget // (2 * K * W_lanes)))
    else:
        R = max(1, min(int(rows_per_tile), H1))
    H1_pad = _round_up(H1, R)
    n_tiles = H1_pad // R
    rows_in = R + dh * (kh - 1)                 # input rows per tile (incl. halo)
    P = R * W_lanes                             # flattened output lanes per tile
    tile_len = _round_up(rows_in * W_lanes + dw * (kw - 1), 128)

    # ---- build haloed, lane-aligned input row-tiles (one wrapper pass) ------------
    H_canvas = H1_pad + dh * (kh - 1)
    xc = x.astype(compute_dtype)
    canvas = jnp.pad(xc, ((0, 0), (0, C_in_p - C_in),
                          (ph, H_canvas - H - ph), (pw, W_lanes - W - pw)))
    row_idx = (np.arange(n_tiles)[:, None] * R
               + np.arange(rows_in)[None, :]).reshape(-1)
    x_tiles = jnp.take(canvas, jnp.asarray(row_idx, dtype=jnp.int32), axis=2)
    x_tiles = x_tiles.reshape(N, C_in_p, n_tiles, rows_in * W_lanes)
    x_tiles = jnp.transpose(x_tiles, (0, 2, 1, 3))   # (N, n_tiles, C_in_p, rows*W)
    if tile_len > rows_in * W_lanes:
        x_tiles = jnp.pad(x_tiles, ((0, 0), (0, 0), (0, 0),
                                    (0, tile_len - rows_in * W_lanes)))

    # ---- folded-tap weight matrix (C_out_p, K), pre-cast once --------------------
    wt = jnp.transpose(weight.astype(jnp.float32), (0, 2, 3, 1))      # (Co,kh,kw,Ci)
    wt = jnp.pad(wt, ((0, C_out_p - C_out), (0, 0), (0, 0), (0, C_in_p - C_in)))
    w2 = wt.reshape(C_out_p, K).astype(compute_dtype)

    scale_p = jnp.pad(scale, (0, C_out_p - C_out)).reshape(C_out_p, 1)
    bias_p = jnp.pad(bias, (0, C_out_p - C_out)).reshape(C_out_p, 1)

    tap_offsets = tuple(int(i * dh * W_lanes + j * dw)
                        for i in range(kh) for j in range(kw))

    kernel = functools.partial(_conv_bn_kernel, tap_offsets=tap_offsets,
                               c_in_p=C_in_p, p_lanes=P)

    cost = pl.CostEstimate(
        flops=2 * N * n_tiles * C_out_p * K * P,
        transcendentals=0,
        bytes_accessed=int(x_tiles.size) * int(x_tiles.dtype.itemsize)
                       + int(w2.size) * int(w2.dtype.itemsize)
                       + int(N * C_out_p * H1_pad * W_lanes) * 4)

    out_flat = pl.pallas_call(
        kernel,
        out_shape=jax.ShapeDtypeStruct((N, C_out_p, H1_pad * W_lanes), jnp.float32),
        grid=(N, n_tiles, n_co),
        in_specs=[
            pl.BlockSpec((co_tile, K), lambda n, t, co: (co, 0)),       # resident-ish
            pl.BlockSpec((co_tile, 1), lambda n, t, co: (co, 0)),
            pl.BlockSpec((co_tile, 1), lambda n, t, co: (co, 0)),
            pl.BlockSpec((1, 1, C_in_p, tile_len),
                         lambda n, t, co: (n, t, 0, 0)),                # haloed tile
        ],
        out_specs=pl.BlockSpec((1, co_tile, P), lambda n, t, co: (n, co, t)),
        scratch_shapes=[pltpu.VMEM((K, P), compute_dtype)],             # im2col slab
        compiler_params=pltpu.CompilerParams(
            dimension_semantics=("parallel", "parallel", "parallel")),
        cost_estimate=cost,
    )(w2, scale_p, bias_p, x_tiles)

    # Free reshape + single crop.  For stride == 1 this is the ONLY post-processing.
    out = out_flat.reshape(N, C_out_p, H1_pad, W_lanes)[:, :C_out, :H1, :W1]
    if sh > 1 or sw > 1:
        # TODO(synk): polyphase decomposition would avoid the dense-conv overcompute.
        out = out[:, :, ::sh, ::sw]
    return out


# ----------------------------- demo / check ----------------------------------

if __name__ == "__main__":
    key = jax.random.PRNGKey(0)
    keys = jax.random.split(key, 8)

    # conv2DBatchNorm(in_channels=4, n_filters=8, k_size=3, stride=1,
    #                 padding=1, bias=True, dilation=1, with_bn=True)
    N, C_in, H, W = 2, 4, 16, 16
    C_out, ksz = 8, 3
    eps = 1e-5

    x = jax.random.normal(keys[0], (N, C_in, H, W), jnp.float32)
    weight = jax.random.normal(keys[1], (C_out, C_in, ksz, ksz), jnp.float32) * 0.1
    conv_b = jax.random.normal(keys[2], (C_out,), jnp.float32) * 0.1
    gamma = jax.random.uniform(keys[3], (C_out,), jnp.float32, 0.5, 1.5)
    beta = jax.random.normal(keys[4], (C_out,), jnp.float32) * 0.1
    r_mean = jax.random.normal(keys[5], (C_out,), jnp.float32) * 0.1
    r_var = jax.random.uniform(keys[6], (C_out,), jnp.float32, 0.5, 1.5)
    bn = (gamma, beta, r_mean, r_var)

    def reference(x, w, b, stride, padding, dilation, bn_p):
        y = lax.conv_general_dilated(
            x, w, window_strides=(stride, stride),
            padding=[(padding, padding), (padding, padding)],
            rhs_dilation=(dilation, dilation),
            dimension_numbers=("NCHW", "OIHW", "NCHW"))
        if b is not None:
            y = y + b[None, :, None, None]
        if bn_p is not None:
            g, be, m, v = bn_p
            y = (y - m[None, :, None, None]) / jnp.sqrt(v[None, :, None, None] + eps)
            y = y * g[None, :, None, None] + be[None, :, None, None]
        return y

    # 1) f32 operand path: tight tolerance (stride=1, padding=1, dilation=1, bias+BN).
    y32 = conv2d_batchnorm(x, weight, conv_b, stride=1, padding=1, dilation=1,
                           bn_params=bn, eps=eps, compute_dtype=jnp.float32)
    y32 = jax.block_until_ready(y32)
    assert y32.shape == (N, C_out, H, W), y32.shape
    np.testing.assert_allclose(np.asarray(y32),
                               np.asarray(reference(x, weight, conv_b, 1, 1, 1, bn)),
                               rtol=1e-4, atol=1e-4)

    # 2) default bf16 operand path (f32 accumulation): looser tolerance.
    ybf = conv2d_batchnorm(x, weight, conv_b, stride=1, padding=1, dilation=1,
                           bn_params=bn, eps=eps)
    ybf = jax.block_until_ready(ybf)
    np.testing.assert_allclose(np.asarray(ybf),
                               np.asarray(reference(x, weight, conv_b, 1, 1, 1, bn)),
                               rtol=5e-2, atol=5e-2)

    # 3) stride=2, dilation=2, no BN (bias only), f32: exercises the general geometry.
    ys2 = conv2d_batchnorm(x, weight, conv_b, stride=2, padding=1, dilation=2,
                           bn_params=None, eps=eps, compute_dtype=jnp.float32)
    ys2 = jax.block_until_ready(ys2)
    ref2 = reference(x, weight, conv_b, 2, 1, 2, None)
    assert ys2.shape == ref2.shape, (ys2.shape, ref2.shape)
    np.testing.assert_allclose(np.asarray(ys2), np.asarray(ref2),
                               rtol=1e-4, atol=1e-4)

    print("KERNEL_OK")
</pallas_src>

<mosaic_0001>
module attributes {stable_mosaic.version = 11 : i64} {
  func.func @_conv_bn_kernel(%arg0: i32, %arg1: i32, %arg2: i32, %arg3: memref<8x72xf32, #tpu.memory_space<vmem>>, %arg4: memref<8x1xf32, #tpu.memory_space<vmem>>, %arg5: memref<8x1xf32, #tpu.memory_space<vmem>>, %arg6: memref<1x1x8x1408xf32, #tpu.memory_space<vmem>>, %arg7: memref<1x8x1024xf32, #tpu.memory_space<vmem>>, %arg8: memref<72x1024xf32, #tpu.memory_space<vmem>>) attributes {dimension_semantics = [#tpu.dimension_semantics<parallel>, #tpu.dimension_semantics<parallel>, #tpu.dimension_semantics<parallel>], iteration_bounds = array<i64: 2, 2, 1>, scalar_prefetch = 0 : i64, scratch_operands = 1 : i64, tpu.core_type = #tpu.core_type<tc>, window_params = [{transform_indices = @transform_0, window_bounds = array<i64: 8, 72>}, {transform_indices = @transform_1, window_bounds = array<i64: 8, 1>}, {transform_indices = @transform_2, window_bounds = array<i64: 8, 1>}, {transform_indices = @transform_3, window_bounds = array<i64: 1, 1, 8, 1408>}, {transform_indices = @transform_4, window_bounds = array<i64: 1, 8, 1024>}]} {
    %c0 = arith.constant 0 : index
    %c0_0 = arith.constant 0 : index
    %c0_1 = arith.constant 0 : index
    %c0_2 = arith.constant 0 : index
    %0 = vector.load %arg6[%c0, %c0_0, %c0_1, %c0_2] : memref<1x1x8x1408xf32, #tpu.memory_space<vmem>>, vector<1x1x8x1024xf32>
    %1 = vector.shape_cast %0 : vector<1x1x8x1024xf32> to vector<8x1024xf32>
    %c0_3 = arith.constant 0 : index
    %c0_4 = arith.constant 0 : index
    %2 = vector.load %arg8[%c0_3, %c0_4] : memref<72x1024xf32, #tpu.memory_space<vmem>>, vector<8x1024xf32>
    tpu.vector_store %arg8[%c0_3, %c0_4], %1 {strides = array<i32>} : memref<72x1024xf32, #tpu.memory_space<vmem>>, vector<8x1024xf32>,
    %c0_5 = arith.constant 0 : index
    %c0_6 = arith.constant 0 : index
    %c0_7 = arith.constant 0 : index
    %c1 = arith.constant 1 : index
    %3 = vector.load %arg6[%c0_5, %c0_6, %c0_7, %c1] : memref<1x1x8x1408xf32, #tpu.memory_space<vmem>>, vector<1x1x8x1024xf32>
    %4 = vector.shape_cast %3 : vector<1x1x8x1024xf32> to vector<8x1024xf32>
    %c8 = arith.constant 8 : index
    %c0_8 = arith.constant 0 : index
    %5 = vector.load %arg8[%c8, %c0_8] : memref<72x1024xf32, #tpu.memory_space<vmem>>, vector<8x1024xf32>
    tpu.vector_store %arg8[%c8, %c0_8], %4 {strides = array<i32>} : memref<72x1024xf32, #tpu.memory_space<vmem>>, vector<8x1024xf32>,
    %c0_9 = arith.constant 0 : index
    %c0_10 = arith.constant 0 : index
    %c0_11 = arith.constant 0 : index
    %c2 = arith.constant 2 : index
    %6 = vector.load %arg6[%c0_9, %c0_10, %c0_11, %c2] : memref<1x1x8x1408xf32, #tpu.memory_space<vmem>>, vector<1x1x8x1024xf32>
    %7 = vector.shape_cast %6 : vector<1x1x8x1024xf32> to vector<8x1024xf32>
    %c16 = arith.constant 16 : index
    %c0_12 = arith.constant 0 : index
    %8 = vector.load %arg8[%c16, %c0_12] : memref<72x1024xf32, #tpu.memory_space<vmem>>, vector<8x1024xf32>
    tpu.vector_store %arg8[%c16, %c0_12], %7 {strides = array<i32>} : memref<72x1024xf32, #tpu.memory_space<vmem>>, vector<8x1024xf32>,
    %c0_13 = arith.constant 0 : index
    %c0_14 = arith.constant 0 : index
    %c0_15 = arith.constant 0 : index
    %c128 = arith.constant 128 : index
    %9 = vector.load %arg6[%c0_13, %c0_14, %c0_15, %c128] : memref<1x1x8x1408xf32, #tpu.memory_space<vmem>>, vector<1x1x8x1024xf32>
    %10 = vector.shape_cast %9 : vector<1x1x8x1024xf32> to vector<8x1024xf32>
    %c24 = arith.constant 24 : index
    %c0_16 = arith.constant 0 : index
    %11 = vector.load %arg8[%c24, %c0_16] : memref<72x1024xf32, #tpu.memory_space<vmem>>, vector<8x1024xf32>
    tpu.vector_store %arg8[%c24, %c0_16], %10 {strides = array<i32>} : memref<72x1024xf32, #tpu.memory_space<vmem>>, vector<8x1024xf32>,
    %c0_17 = arith.constant 0 : index
    %c0_18 = arith.constant 0 : index
    %c0_19 = arith.constant 0 : index
    %c129 = arith.constant 129 : index
    %12 = vector.load %arg6[%c0_17, %c0_18, %c0_19, %c129] : memref<1x1x8x1408xf32, #tpu.memory_space<vmem>>, vector<1x1x8x1024xf32>
    %13 = vector.shape_cast %12 : vector<1x1x8x1024xf32> to vector<8x1024xf32>
    %c32 = arith.constant 32 : index
    %c0_20 = arith.constant 0 : index
    %14 = vector.load %arg8[%c32, %c0_20] : memref<72x1024xf32, #tpu.memory_space<vmem>>, vector<8x1024xf32>
    tpu.vector_store %arg8[%c32, %c0_20], %13 {strides = array<i32>} : memref<72x1024xf32, #tpu.memory_space<vmem>>, vector<8x1024xf32>,
    %c0_21 = arith.constant 0 : index
    %c0_22 = arith.constant 0 : index
    %c0_23 = arith.constant 0 : index
    %c130 = arith.constant 130 : index
    %15 = vector.load %arg6[%c0_21, %c0_22, %c0_23, %c130] : memref<1x1x8x1408xf32, #tpu.memory_space<vmem>>, vector<1x1x8x1024xf32>
    %16 = vector.shape_cast %15 : vector<1x1x8x1024xf32> to vector<8x1024xf32>
    %c40 = arith.constant 40 : index
    %c0_24 = arith.constant 0 : index
    %17 = vector.load %arg8[%c40, %c0_24] : memref<72x1024xf32, #tpu.memory_space<vmem>>, vector<8x1024xf32>
    tpu.vector_store %arg8[%c40, %c0_24], %16 {strides = array<i32>} : memref<72x1024xf32, #tpu.memory_space<vmem>>, vector<8x1024xf32>,
    %c0_25 = arith.constant 0 : index
    %c0_26 = arith.constant 0 : index
    %c0_27 = arith.constant 0 : index
    %c256 = arith.constant 256 : index
    %18 = vector.load %arg6[%c0_25, %c0_26, %c0_27, %c256] : memref<1x1x8x1408xf32, #tpu.memory_space<vmem>>, vector<1x1x8x1024xf32>
    %19 = vector.shape_cast %18 : vector<1x1x8x1024xf32> to vector<8x1024xf32>
    %c48 = arith.constant 48 : index
    %c0_28 = arith.constant 0 : index
    %20 = vector.load %arg8[%c48, %c0_28] : memref<72x1024xf32, #tpu.memory_space<vmem>>, vector<8x1024xf32>
    tpu.vector_store %arg8[%c48, %c0_28], %19 {strides = array<i32>} : memref<72x1024xf32, #tpu.memory_space<vmem>>, vector<8x1024xf32>,
    %c0_29 = arith.constant 0 : index
    %c0_30 = arith.constant 0 : index
    %c0_31 = arith.constant 0 : index
    %c257 = arith.constant 257 : index
    %21 = vector.load %arg6[%c0_29, %c0_30, %c0_31, %c257] : memref<1x1x8x1408xf32, #tpu.memory_space<vmem>>, vector<1x1x8x1024xf32>
    %22 = vector.shape_cast %21 : vector<1x1x8x1024xf32> to vector<8x1024xf32>
    %c56 = arith.constant 56 : index
    %c0_32 = arith.constant 0 : index
    %23 = vector.load %arg8[%c56, %c0_32] : memref<72x1024xf32, #tpu.memory_space<vmem>>, vector<8x1024xf32>
    tpu.vector_store %arg8[%c56, %c0_32], %22 {strides = array<i32>} : memref<72x1024xf32, #tpu.memory_space<vmem>>, vector<8x1024xf32>,
    %c0_33 = arith.constant 0 : index
    %c0_34 = arith.constant 0 : index
    %c0_35 = arith.constant 0 : index
    %c258 = arith.constant 258 : index
    %24 = vector.load %arg6[%c0_33, %c0_34, %c0_35, %c258] : memref<1x1x8x1408xf32, #tpu.memory_space<vmem>>, vector<1x1x8x1024xf32>
    %25 = vector.shape_cast %24 : vector<1x1x8x1024xf32> to vector<8x1024xf32>
    %c64 = arith.constant 64 : index
    %c0_36 = arith.constant 0 : index
    %26 = vector.load %arg8[%c64, %c0_36] : memref<72x1024xf32, #tpu.memory_space<vmem>>, vector<8x1024xf32>
    tpu.vector_store %arg8[%c64, %c0_36], %25 {strides = array<i32>} : memref<72x1024xf32, #tpu.memory_space<vmem>>, vector<8x1024xf32>,
    %c0_37 = arith.constant 0 : index
    %c0_38 = arith.constant 0 : index
    %27 = vector.load %arg3[%c0_37, %c0_38] : memref<8x72xf32, #tpu.memory_space<vmem>>, vector<8x72xf32>
    %c0_39 = arith.constant 0 : index
    %c0_40 = arith.constant 0 : index
    %28 = vector.load %arg8[%c0_39, %c0_40] : memref<72x1024xf32, #tpu.memory_space<vmem>>, vector<72x1024xf32>
    %cst = arith.constant dense<0.000000e+00> : vector<8x1024xf32>
    %29 = tpu.matmul %27, %28, %cst {dimension_numbers = #tpu.dot_dimension_numbers<[1], [0], [0], [1], [0, 0, 1, 1], [], []>} : vector<8x72xf32>, vector<72x1024xf32>, vector<8x1024xf32> -> vector<8x1024xf32>
    %c0_41 = arith.constant 0 : index
    %c0_42 = arith.constant 0 : index
    %30 = vector.load %arg4[%c0_41, %c0_42] : memref<8x1xf32, #tpu.memory_space<vmem>>, vector<8x1xf32>
    %31 = vector.broadcast %30 : vector<8x1xf32> to vector<8x1024xf32>
    %32 = arith.mulf %29, %31 : vector<8x1024xf32>
    %c0_43 = arith.constant 0 : index
    %c0_44 = arith.constant 0 : index
    %33 = vector.load %arg5[%c0_43, %c0_44] : memref<8x1xf32, #tpu.memory_space<vmem>>, vector<8x1xf32>
    %34 = vector.broadcast %33 : vector<8x1xf32> to vector<8x1024xf32>
    %35 = arith.addf %32, %34 : vector<8x1024xf32>
    %c0_45 = arith.constant 0 : index
    %c0_46 = arith.constant 0 : index
    %c0_47 = arith.constant 0 : index
    %36 = vector.load %arg7[%c0_45, %c0_46, %c0_47] : memref<1x8x1024xf32, #tpu.memory_space<vmem>>, vector<1x8x1024xf32>
    %37 = vector.shape_cast %36 : vector<1x8x1024xf32> to vector<8x1024xf32>
    %38 = vector.shape_cast %35 : vector<8x1024xf32> to vector<1x8x1024xf32>
    tpu.vector_store %arg7[%c0_45, %c0_46, %c0_47], %38 {strides = array<i32>} : memref<1x8x1024xf32, #tpu.memory_space<vmem>>, vector<1x8x1024xf32>,
    return
  }
  func.func @transform_0(%arg0: i32, %arg1: i32, %arg2: i32) -> (i32, i32) {
    %c0_i32 = arith.constant 0 : i32
    %c0_i32_0 = arith.constant 0 : i32
    return %arg2, %c0_i32 : i32, i32
  }
  func.func @transform_1(%arg0: i32, %arg1: i32, %arg2: i32) -> (i32, i32) {
    %c0_i32 = arith.constant 0 : i32
    %c0_i32_0 = arith.constant 0 : i32
    return %arg2, %c0_i32 : i32, i32
  }
  func.func @transform_2(%arg0: i32, %arg1: i32, %arg2: i32) -> (i32, i32) {
    %c0_i32 = arith.constant 0 : i32
    %c0_i32_0 = arith.constant 0 : i32
    return %arg2, %c0_i32 : i32, i32
  }
  func.func @transform_3(%arg0: i32, %arg1: i32, %arg2: i32) -> (i32, i32, i32, i32) {
    %c0_i32 = arith.constant 0 : i32
    %c0_i32_0 = arith.constant 0 : i32
    %c0_i32_1 = arith.constant 0 : i32
    return %arg0, %arg1, %c0_i32, %c0_i32_0 : i32, i32, i32, i32
  }
  func.func @transform_4(%arg0: i32, %arg1: i32, %arg2: i32) -> (i32, i32, i32) {
    %c0_i32 = arith.constant 0 : i32
    return %arg0, %arg2, %arg1 : i32, i32, i32
  }
}

</mosaic_0001>

<llo_original>
// kernel: tpu_custom_call.1
$region0: #{tpu_custom_call.1}
  #allocation0 [shape = 'u32[]', space=smem, size = 0x4, offset = 0x4, fixed_abs, tag = 'smem constant byte address 0x4 - core index']
  #allocation1 [shape = 'u32[144,128]{1,0:T(1,128)}', space=vmem, size = 0x12000, scoped, tag = 'internal scratch']
  #allocation2 [shape = 'f32[72,1024]{1,0:T(8,128)}', space=vmem, size = 0x48000, scoped, tag = 'scratch operand']
  %s0 = inlined_call_operand.vmem [shape: f32[8,72], index: 0, kind: input, shape index: {}]
  %s1 = inlined_call_operand.vmem [shape: f32[8,1], index: 1, kind: input, shape index: {}]
  %s2 = inlined_call_operand.vmem [shape: f32[8,1], index: 2, kind: input, shape index: {}]
  %s3 = inlined_call_operand.hbm [shape: f32[2,2,8,1408], index: 3, kind: input, shape index: {}]
  %s4 = inlined_call_operand.hbm [shape: f32[2,8,2048], index: 4, kind: output, shape index: {}]
  %s5 = sld [smem:[#allocation0]]
  $region53: #{tpu_custom_call.1} parent=0
    _
  %s7 = ssub.s32 1, %s5
  %s8 = scalar_select 0, %s7, %s5
  $region1: #{tpu_custom_call.1} parent=0
    #allocation3 [shape = 'u8[90112]{0}', space=vmem, size = 0x16000, scoped, tag = 'input window, operand 3']
    #allocation4 [shape = 's32[2]{0}', space=sflag, size = 0x8, scoped, tag = 'scoped memory for tpu_custom_call.1']
    #allocation5 [shape = 's32[2]{0}', space=sflag, size = 0x8, scoped, tag = 'scoped memory for tpu_custom_call.1']
    #allocation6 [shape = 'u8[65536]{0}', space=vmem, size = 0x10000, scoped, tag = 'output window, operand 0']
    %9 = vsyncpa [#allocation4], 0
    %s10 = scalar_lea.sflag [#allocation4], 1
    %11 = vsyncpa %s10, 0
    %12 = vsyncpa [#allocation5], 0
    %s13 = scalar_lea.sflag [#allocation5], 1
    %14 = vsyncpa %s13, 0
    loop: start=0, step=1, limit=6
    $region2: #{tpu_custom_call.1} parent=1 // loop_pre_header
      _
    $region3: #{tpu_custom_call.1} parent=1 // loop_header
      %s16 = sphi 0, %s20
      %p17 = scmp.ge.s32.totalorder %s16, 6
      %s23 = sphi 0, %s42
      %s24 = sphi 0, %s38
      %s25 = sphi 0, %s34
      %s26 = sphi 0, %s23
      %s27 = sphi 0, %s24
      %s28 = sphi 0, %s25
      %s29 = sphi 0, %s26
      %s30 = sphi 0, %s27
      %s31 = sphi 0, %s28
      %s45 = sphi 0, %s47
      %s48 = sphi 0, %s45
      %s49 = sphi 0, %s48
      %s65 = sphi 0, %s49
      %s71 = sphi 0, %s73
      %s74 = sphi 0, %s71
      %s75 = sphi 0, %s74
      %s91 = sphi 0, %s75
      %s97 = sphi 0, %s99
      %s100 = sphi 0, %s97
      %s101 = sphi 0, %s100
      %s117 = sphi 0, %s101
      %s125 = sphi 0, %s127
      %s128 = sphi 0, %s125
      %s129 = sphi 0, %s128
      %s145 = sphi 0, %s129
      %s155 = sphi 0, %s157
      %s158 = sphi 0, %s155
      %s159 = sphi 0, %s158
      %s175 = sphi 0, %s159
    $region4: #{tpu_custom_call.1} parent=1 // loop_header_branch
      %19 = sbr.rel (%p17) target = $region8
    $region5: #{tpu_custom_call.1} parent=1 // loop_body
      %s21 = ssub.s32 %s16, 1
      %s22 = ssub.s32 %s16, 2
      %s32 = sadd.s32 1, %s25
      %p33 = scmp.ge.s32.totalorder %s32, 1
      %s34 = scalar_select %p33, 0, %s32
      %s35 = sadd.s32 1, %s24
      %s36 = scalar_select %p33, %s35, %s24
      %p37 = scmp.ge.s32.totalorder %s36, 2
      %s38 = scalar_select %p37, 0, %s36
      %s39 = sadd.s32 1, %s23
      %s40 = scalar_select %p37, %s39, %s23
      %p41 = scmp.ge.s32.totalorder %s40, 2
      %s42 = scalar_select %p41, 0, %s40
      %s43 = ssub.s32 %s25, %s34
      %p44 = scmp.eq.s32.totalorder %s43, 0
      %s46 = sadd.s32 %s45, 1
      %s47 = scalar_select %p44, %s45, %s46
      %p50 = pneg %p44
      %p51 = scmp.eq.s32.totalorder %s16, 3
      %p52 = por %p50, %p51
      %p53 = scmp.ne.s32.totalorder %s45, %s48
      %p54 = scmp.eq.s32.totalorder %s16, 0
      %p55 = por %p53, %p54
      %p56 = scmp.ne.s32.totalorder %s45, %s48
      %p57 = scmp.eq.s32.totalorder %s21, 3
      %p58 = por %p56, %p57
      %p59 = scmp.ne.s32.totalorder %s48, %s49
      %p60 = scmp.eq.s32.totalorder %s21, 0
      %p61 = por %p59, %p60
      %p62 = scmp.ne.s32.totalorder %s48, %s49
      %p63 = scmp.eq.s32.totalorder %s22, 3
      %p64 = por %p62, %p63
      %p66 = scmp.ne.s32.totalorder %s49, %s65
      %p67 = scmp.eq.s32.totalorder %s22, 0
      %p68 = por %p66, %p67
      %s69 = ssub.s32 %s25, %s34
      %p70 = scmp.eq.s32.totalorder %s69, 0
      %s72 = sadd.s32 %s71, 1
      %s73 = scalar_select %p70, %s71, %s72
      %p76 = pneg %p70
      %p77 = scmp.eq.s32.totalorder %s16, 3
      %p78 = por %p76, %p77
      %p79 = scmp.ne.s32.totalorder %s71, %s74
      %p80 = scmp.eq.s32.totalorder %s16, 0
      %p81 = por %p79, %p80
      %p82 = scmp.ne.s32.totalorder %s71, %s74
      %p83 = scmp.eq.s32.totalorder %s21, 3
      %p84 = por %p82, %p83
      %p85 = scmp.ne.s32.totalorder %s74, %s75
      %p86 = scmp.eq.s32.totalorder %s21, 0
      %p87 = por %p85, %p86
      %p88 = scmp.ne.s32.totalorder %s74, %s75
      %p89 = scmp.eq.s32.totalorder %s22, 3
      %p90 = por %p88, %p89
      %p92 = scmp.ne.s32.totalorder %s75, %s91
      %p93 = scmp.eq.s32.totalorder %s22, 0
      %p94 = por %p92, %p93
      %s95 = ssub.s32 %s25, %s34
      %p96 = scmp.eq.s32.totalorder %s95, 0
      %s98 = sadd.s32 %s97, 1
      %s99 = scalar_select %p96, %s97, %s98
      %p102 = pneg %p96
      %p103 = scmp.eq.s32.totalorder %s16, 3
      %p104 = por %p102, %p103
      %p105 = scmp.ne.s32.totalorder %s97, %s100
      %p106 = scmp.eq.s32.totalorder %s16, 0
      %p107 = por %p105, %p106
      %p108 = scmp.ne.s32.totalorder %s97, %s100
      %p109 = scmp.eq.s32.totalorder %s21, 3
      %p110 = por %p108, %p109
      %p111 = scmp.ne.s32.totalorder %s100, %s101
      %p112 = scmp.eq.s32.totalorder %s21, 0
      %p113 = por %p111, %p112
      %p114 = scmp.ne.s32.totalorder %s100, %s101
      %p115 = scmp.eq.s32.totalorder %s22, 3
      %p116 = por %p114, %p115
      %p118 = scmp.ne.s32.totalorder %s101, %s117
      %p119 = scmp.eq.s32.totalorder %s22, 0
      %p120 = por %p118, %p119
      %s121 = ssub.s32 %s23, %s42
      %s122 = ssub.s32 %s24, %s38
      %s123 = sor.u32 %s121, %s122
      %p124 = scmp.eq.s32.totalorder %s123, 0
      %s126 = sadd.s32 %s125, 1
      %s127 = scalar_select %p124, %s125, %s126
      %p130 = pneg %p124
      %p131 = scmp.eq.s32.totalorder %s16, 3
      %p132 = por %p130, %p131
      %p133 = scmp.ne.s32.totalorder %s125, %s128
      %p134 = scmp.eq.s32.totalorder %s16, 0
      %p135 = por %p133, %p134
      %p136 = scmp.ne.s32.totalorder %s125, %s128
      %p137 = scmp.eq.s32.totalorder %s21, 3
      %p138 = por %p136, %p137
      %p139 = scmp.ne.s32.totalorder %s128, %s129
      %p140 = scmp.eq.s32.totalorder %s21, 0
      %p141 = por %p139, %p140
      %p142 = scmp.ne.s32.totalorder %s128, %s129
      %p143 = scmp.eq.s32.totalorder %s22, 3
      %p144 = por %p142, %p143
      %p146 = scmp.ne.s32.totalorder %s129, %s145
      %p147 = scmp.eq.s32.totalorder %s22, 0
      %p148 = por %p146, %p147
      %s149 = ssub.s32 %s23, %s42
      %s150 = ssub.s32 %s25, %s34
      %s151 = sor.u32 %s149, %s150
      %s152 = ssub.s32 %s24, %s38
      %s153 = sor.u32 %s151, %s152
      %p154 = scmp.eq.s32.totalorder %s153, 0
      %s156 = sadd.s32 %s155, 1
      %s157 = scalar_select %p154, %s155, %s156
      %p160 = pneg %p154
      %p161 = scmp.eq.s32.totalorder %s16, 3
      %p162 = por %p160, %p161
      %p163 = scmp.ne.s32.totalorder %s155, %s158
      %p164 = scmp.eq.s32.totalorder %s16, 0
      %p165 = por %p163, %p164
      %p166 = scmp.ne.s32.totalorder %s155, %s158
      %p167 = scmp.eq.s32.totalorder %s21, 3
      %p168 = por %p166, %p167
      %p169 = scmp.ne.s32.totalorder %s158, %s159
      %p170 = scmp.eq.s32.totalorder %s21, 0
      %p171 = por %p169, %p170
      %p172 = scmp.ne.s32.totalorder %s158, %s159
      %p173 = scmp.eq.s32.totalorder %s22, 3
      %p174 = por %p172, %p173
      %p176 = scmp.ne.s32.totalorder %s159, %s175
      %p177 = scmp.eq.s32.totalorder %s22, 0
      %p178 = por %p176, %p177
      %p179 = scmp.le.s32.totalorder 1, %s16
      %p180 = scmp.lt.s32.totalorder %s16, 5
      %p181 = pnand %p179, %p180
      %p182 = pneg %p181
      // Predicated region
      $region9: #{tpu_custom_call.1} parent=5 // pred_check
        _
      $region10: #{tpu_custom_call.1} parent=5 // pred_check_branch
        %184 = sbr.rel (%p181) target = $region12
      $region11: #{tpu_custom_call.1} parent=5 // pred_region
        %s185 = ssub.s32 %s16, 1
        // Predicated region
        $region13: #{tpu_custom_call.1} parent=11 // pred_check
          %p186 = pneg %p61
        $region14: #{tpu_custom_call.1} parent=11 // pred_check_branch
          %188 = sbr.rel (%p186) target = $region16
        $region15: #{tpu_custom_call.1} parent=11 // pred_region
          %p189 = scmp.lt.s32.totalorder %s28, 0
          %s190 = scalar_select %p189, %s28, 0
          %s191 = smul.addr %s190, 8
          %s192 = scalar_lea.vmem %s0, %s191
        $region16: #{tpu_custom_call.1} parent=11 // pred_fallthru
          _
        // Predicated region
        $region17: #{tpu_custom_call.1} parent=11 // pred_check
          %p193 = pneg %p87
        $region18: #{tpu_custom_call.1} parent=11 // pred_check_branch
          %195 = sbr.rel (%p193) target = $region20
        $region19: #{tpu_custom_call.1} parent=11 // pred_region
          %p196 = scmp.lt.s32.totalorder %s28, 0
          %s197 = scalar_select %p196, %s28, 0
          %s198 = smul.addr %s197, 8
          %s199 = scalar_lea.vmem %s1, %s198
        $region20: #{tpu_custom_call.1} parent=11 // pred_fallthru
          _
        // Predicated region
        $region21: #{tpu_custom_call.1} parent=11 // pred_check
          %p200 = pneg %p113
        $region22: #{tpu_custom_call.1} parent=11 // pred_check_branch
          %202 = sbr.rel (%p200) target = $region24
        $region23: #{tpu_custom_call.1} parent=11 // pred_region
          %p203 = scmp.lt.s32.totalorder %s28, 0
          %s204 = scalar_select %p203, %s28, 0
          %s205 = smul.addr %s204, 8
          %s206 = scalar_lea.vmem %s2, %s205
        $region24: #{tpu_custom_call.1} parent=11 // pred_fallthru
          _
      $region12: #{tpu_custom_call.1} parent=5 // pred_fallthru
        _
      %p207 = scmp.lt.s32.totalorder %s16, 4
      // Predicated region
      $region25: #{tpu_custom_call.1} parent=5 // pred_check
        %p208 = pneg %p207
      $region26: #{tpu_custom_call.1} parent=5 // pred_check_branch
        %210 = sbr.rel (%p208) target = $region28
      $region27: #{tpu_custom_call.1} parent=5 // pred_region
        // Predicated region
        $region29: #{tpu_custom_call.1} parent=27 // pred_check
          %p211 = pneg %p135
        $region30: #{tpu_custom_call.1} parent=27 // pred_check_branch
          %213 = sbr.rel (%p211) target = $region32
        $region31: #{tpu_custom_call.1} parent=27 // pred_region
          %s214 = sand.u32 %s125, 1
          %s215 = scalar_lea.sflag [#allocation4], %s214
          %s216 = sand.u32 %s125, 1
          %s217 = smul.addr %s216, 88
          %s218 = scalar_lea.vmem [#allocation3], %s217
          %s220 = ssub.s32 1408, 1408
          %221 = vsyncadd %s215, %s220
          %s222 = smul.addr %s24, 11
          %s223 = smul.addr %s23, 22
          %s224 = sadd.s32 %s222, %s223
          %s225 = smul.addr %s224, 128
          %s226 = scalar_lea.hbm %s3, %s225
          %s228 = sshll.u32 %s218, 4
          %s229 = int_to_ptr.vmem [resolvable:$true] %s228
          %231 = dma.hbm_to_vmem [thread:$0]  %s226, 1408, %s229, %s215
        $region32: #{tpu_custom_call.1} parent=27 // pred_fallthru
          _
      $region28: #{tpu_custom_call.1} parent=5 // pred_fallthru
        _
      %p232 = scmp.le.s32.totalorder 1, %s16
      %p233 = scmp.lt.s32.totalorder %s16, 5
      %p234 = pnand %p232, %p233
      %p235 = pneg %p234
      // Predicated region
      $region33: #{tpu_custom_call.1} parent=5 // pred_check
        _
      $region34: #{tpu_custom_call.1} parent=5 // pred_check_branch
        %237 = sbr.rel (%p234) target = $region36
      $region35: #{tpu_custom_call.1} parent=5 // pred_region
        %s238 = ssub.s32 %s16, 1
        %s239 = sand.u32 %s128, 1
        %s240 = scalar_lea.sflag [#allocation4], %s239
        %s241 = sand.u32 %s128, 1
        %s242 = smul.addr %s241, 88
        %s243 = scalar_lea.vmem [#allocation3], %s242
        // Predicated region
        $region37: #{tpu_custom_call.1} parent=35 // pred_check
          %p244 = pneg %p141
        $region38: #{tpu_custom_call.1} parent=35 // pred_check_branch
          %246 = sbr.rel (%p244) target = $region40
        $region39: #{tpu_custom_call.1} parent=35 // pred_region
          %247 = dma.done %s240, 1408
        $region40: #{tpu_custom_call.1} parent=35 // pred_fallthru
          _
        %p248 = scmp.lt.s32.totalorder %s28, 0
        %s249 = scalar_select %p248, %s28, 0
        %s250 = smul.addr %s249, 8
        %s251 = scalar_lea.vmem %s0, %s250
        %p252 = pneg %p61
        %p253 = pneg %p58
        %p254 = scmp.lt.s32.totalorder %s28, 0
        %s255 = scalar_select %p254, %s28, 0
        %s256 = smul.addr %s255, 8
        %s257 = scalar_lea.vmem %s1, %s256
        %p258 = pneg %p87
        %p259 = pneg %p84
        %p260 = scmp.lt.s32.totalorder %s28, 0
        %s261 = scalar_select %p260, %s28, 0
        %s262 = smul.addr %s261, 8
        %s263 = scalar_lea.vmem %s2, %s262
        %p264 = pneg %p113
        %p265 = pneg %p110
        %s266 = sand.u32 %s128, 1
        %s267 = scalar_lea.sflag [#allocation4], %s266
        %s268 = sand.u32 %s128, 1
        %s269 = smul.addr %s268, 88
        %s270 = scalar_lea.vmem [#allocation3], %s269
        %p271 = pneg %p141
        %p272 = pneg %p138
        %p273 = pneg %p171
        %p274 = pneg %p168
        %s275 = sand.u32 %s158, 1
        %s276 = scalar_lea.sflag [#allocation5], %s275
        %s277 = sand.u32 %s158, 1
        %s278 = smul.addr %s277, 64
        %s279 = scalar_lea.vmem [#allocation6], %s278
        %p280 = scmp.lt.s32.totalorder %s28, 0
        %s281 = scalar_select %p280, %s28, 0
        %s282 = smul.addr %s281, 8
        %s283 = scalar_lea.vmem %s0, %s282
        %p284 = scmp.lt.s32.totalorder %s28, 0
        %s285 = scalar_select %p284, %s28, 0
        %s286 = smul.addr %s285, 8
        %s287 = scalar_lea.vmem %s1, %s286
        %p288 = scmp.lt.s32.totalorder %s28, 0
        %s289 = scalar_select %p288, %s28, 0
        %s290 = smul.addr %s289, 8
        %s291 = scalar_lea.vmem %s2, %s290
        %s292 = smul.u32 8, %s27
        %v293 = vld [vmem:[%s243] sm:$0xff]
        %v294 = vld [vmem:[%s243 + $0x8] sm:$0xff]
        %v295 = vld [vmem:[%s243 + $0x10] sm:$0xff]
        %v296 = vld [vmem:[%s243 + $0x18] sm:$0xff]
        %v297 = vld [vmem:[%s243 + $0x20] sm:$0xff]
        %v298 = vld [vmem:[%s243 + $0x28] sm:$0xff]
        %v299 = vld [vmem:[%s243 + $0x30] sm:$0xff]
        %v300 = vld [vmem:[%s243 + $0x38] sm:$0xff]
        %301 = vst [vmem:[#allocation2] sm:$0xff] %v293
        %302 = vst [vmem:[#allocation2 + $0x8] sm:$0xff] %v294
        %303 = vst [vmem:[#allocation2 + $0x10] sm:$0xff] %v295
        %304 = vst [vmem:[#allocation2 + $0x18] sm:$0xff] %v296
        %305 = vst [vmem:[#allocation2 + $0x20] sm:$0xff] %v297
        %306 = vst [vmem:[#allocation2 + $0x28] sm:$0xff] %v298
        %307 = vst [vmem:[#allocation2 + $0x30] sm:$0xff] %v299
        %308 = vst [vmem:[#allocation2 + $0x38] sm:$0xff] %v300
        %v309 = vld [vmem:[%s243] sm:$0xff]
        %v310 = vld [vmem:[%s243 + $0x8] sm:$0xff]
        %v311 = vld [vmem:[%s243 + $0x10] sm:$0xff]
        %v312 = vld [vmem:[%s243 + $0x18] sm:$0xff]
        %v313 = vld [vmem:[%s243 + $0x20] sm:$0xff]
        %v314 = vld [vmem:[%s243 + $0x28] sm:$0xff]
        %v315 = vld [vmem:[%s243 + $0x30] sm:$0xff]
        %v316 = vld [vmem:[%s243 + $0x38] sm:$0xff]
        %v317 = vld [vmem:[%s243 + $0x40] sm:$0xff]
        %327 = vrot.lane.b32.xlu0 %v309, 127
        %v328 = vpop.permute.xlu0 %327
        %329 = vrot.lane.b32.xlu0 %v310, 127
        %v330 = vpop.permute.xlu0 %329
        %331 = vrot.lane.b32.xlu0 %v311, 127
        %v332 = vpop.permute.xlu0 %331
        %333 = vrot.lane.b32.xlu0 %v312, 127
        %v334 = vpop.permute.xlu0 %333
        %335 = vrot.lane.b32.xlu0 %v313, 127
        %v336 = vpop.permute.xlu0 %335
        %337 = vrot.lane.b32.xlu0 %v314, 127
        %v338 = vpop.permute.xlu0 %337
        %339 = vrot.lane.b32.xlu0 %v315, 127
        %v340 = vpop.permute.xlu0 %339
        %341 = vrot.lane.b32.xlu0 %v316, 127
        %v342 = vpop.permute.xlu0 %341
        %343 = vrot.lane.b32.xlu0 %v317, 127
        %v344 = vpop.permute.xlu0 %343
        %vm345 = vcmask 1039360
        %v346 = vsel %vm345, %v328, %v330
        %v347 = vsel %vm345, %v330, %v332
        %v348 = vsel %vm345, %v332, %v334
        %v349 = vsel %vm345, %v334, %v336
        %v350 = vsel %vm345, %v336, %v338
        %v351 = vsel %vm345, %v338, %v340
        %v352 = vsel %vm345, %v340, %v342
        %v353 = vsel %vm345, %v342, %v344
        %362 = vst [vmem:[#allocation2 + $0x40] sm:$0xff] %v346
        %363 = vst [vmem:[#allocation2 + $0x48] sm:$0xff] %v347
        %364 = vst [vmem:[#allocation2 + $0x50] sm:$0xff] %v348
        %365 = vst [vmem:[#allocation2 + $0x58] sm:$0xff] %v349
        %366 = vst [vmem:[#allocation2 + $0x60] sm:$0xff] %v350
        %367 = vst [vmem:[#allocation2 + $0x68] sm:$0xff] %v351
        %368 = vst [vmem:[#allocation2 + $0x70] sm:$0xff] %v352
        %369 = vst [vmem:[#allocation2 + $0x78] sm:$0xff] %v353
        %v370 = vld [vmem:[%s243] sm:$0xff]
        %v371 = vld [vmem:[%s243 + $0x8] sm:$0xff]
        %v372 = vld [vmem:[%s243 + $0x10] sm:$0xff]
        %v373 = vld [vmem:[%s243 + $0x18] sm:$0xff]
        %v374 = vld [vmem:[%s243 + $0x20] sm:$0xff]
        %v375 = vld [vmem:[%s243 + $0x28] sm:$0xff]
        %v376 = vld [vmem:[%s243 + $0x30] sm:$0xff]
        %v377 = vld [vmem:[%s243 + $0x38] sm:$0xff]
        %v378 = vld [vmem:[%s243 + $0x40] sm:$0xff]
        %388 = vrot.lane.b32.xlu0 %v370, 126
        %v389 = vpop.permute.xlu0 %388
        %390 = vrot.lane.b32.xlu0 %v371, 126
        %v391 = vpop.permute.xlu0 %390
        %392 = vrot.lane.b32.xlu0 %v372, 126
        %v393 = vpop.permute.xlu0 %392
        %394 = vrot.lane.b32.xlu0 %v373, 126
        %v395 = vpop.permute.xlu0 %394
        %396 = vrot.lane.b32.xlu0 %v374, 126
        %v397 = vpop.permute.xlu0 %396
        %398 = vrot.lane.b32.xlu0 %v375, 126
        %v399 = vpop.permute.xlu0 %398
        %400 = vrot.lane.b32.xlu0 %v376, 126
        %v401 = vpop.permute.xlu0 %400
        %402 = vrot.lane.b32.xlu0 %v377, 126
        %v403 = vpop.permute.xlu0 %402
        %404 = vrot.lane.b32.xlu0 %v378, 126
        %v405 = vpop.permute.xlu0 %404
        %vm406 = vcmask 1031168
        %v407 = vsel %vm406, %v389, %v391
        %v408 = vsel %vm406, %v391, %v393
        %v409 = vsel %vm406, %v393, %v395
        %v410 = vsel %vm406, %v395, %v397
        %v411 = vsel %vm406, %v397, %v399
        %v412 = vsel %vm406, %v399, %v401
        %v413 = vsel %vm406, %v401, %v403
        %v414 = vsel %vm406, %v403, %v405
        %423 = vst [vmem:[#allocation2 + $0x80] sm:$0xff] %v407
        %424 = vst [vmem:[#allocation2 + $0x88] sm:$0xff] %v408
        %425 = vst [vmem:[#allocation2 + $0x90] sm:$0xff] %v409
        %426 = vst [vmem:[#allocation2 + $0x98] sm:$0xff] %v410
        %427 = vst [vmem:[#allocation2 + $0xa0] sm:$0xff] %v411
        %428 = vst [vmem:[#allocation2 + $0xa8] sm:$0xff] %v412
        %429 = vst [vmem:[#allocation2 + $0xb0] sm:$0xff] %v413
        %430 = vst [vmem:[#allocation2 + $0xb8] sm:$0xff] %v414
        %v431 = vld [vmem:[%s243 + $0x8] sm:$0xff]
        %v432 = vld [vmem:[%s243 + $0x10] sm:$0xff]
        %v433 = vld [vmem:[%s243 + $0x18] sm:$0xff]
        %v434 = vld [vmem:[%s243 + $0x20] sm:$0xff]
        %v435 = vld [vmem:[%s243 + $0x28] sm:$0xff]
        %v436 = vld [vmem:[%s243 + $0x30] sm:$0xff]
        %v437 = vld [vmem:[%s243 + $0x38] sm:$0xff]
        %v438 = vld [vmem:[%s243 + $0x40] sm:$0xff]
        %439 = vst [vmem:[#allocation2 + $0xc0] sm:$0xff] %v431
        %440 = vst [vmem:[#allocation2 + $0xc8] sm:$0xff] %v432
        %441 = vst [vmem:[#allocation2 + $0xd0] sm:$0xff] %v433
        %442 = vst [vmem:[#allocation2 + $0xd8] sm:$0xff] %v434
        %443 = vst [vmem:[#allocation2 + $0xe0] sm:$0xff] %v435
        %444 = vst [vmem:[#allocation2 + $0xe8] sm:$0xff] %v436
        %445 = vst [vmem:[#allocation2 + $0xf0] sm:$0xff] %v437
        %446 = vst [vmem:[#allocation2 + $0xf8] sm:$0xff] %v438
        %v447 = vld [vmem:[%s243 + $0x8] sm:$0xff]
        %v448 = vld [vmem:[%s243 + $0x10] sm:$0xff]
        %v449 = vld [vmem:[%s243 + $0x18] sm:$0xff]
        %v450 = vld [vmem:[%s243 + $0x20] sm:$0xff]
        %v451 = vld [vmem:[%s243 + $0x28] sm:$0xff]
        %v452 = vld [vmem:[%s243 + $0x30] sm:$0xff]
        %v453 = vld [vmem:[%s243 + $0x38] sm:$0xff]
        %v454 = vld [vmem:[%s243 + $0x40] sm:$0xff]
        %v455 = vld [vmem:[%s243 + $0x48] sm:$0xff]
        %465 = vrot.lane.b32.xlu0 %v447, 127
        %v466 = vpop.permute.xlu0 %465
        %467 = vrot.lane.b32.xlu0 %v448, 127
        %v468 = vpop.permute.xlu0 %467
        %469 = vrot.lane.b32.xlu0 %v449, 127
        %v470 = vpop.permute.xlu0 %469
        %471 = vrot.lane.b32.xlu0 %v450, 127
        %v472 = vpop.permute.xlu0 %471
        %473 = vrot.lane.b32.xlu0 %v451, 127
        %v474 = vpop.permute.xlu0 %473
        %475 = vrot.lane.b32.xlu0 %v452, 127
        %v476 = vpop.permute.xlu0 %475
        %477 = vrot.lane.b32.xlu0 %v453, 127
        %v478 = vpop.permute.xlu0 %477
        %479 = vrot.lane.b32.xlu0 %v454, 127
        %v480 = vpop.permute.xlu0 %479
        %481 = vrot.lane.b32.xlu0 %v455, 127
        %v482 = vpop.permute.xlu0 %481
        %v483 = vsel %vm345, %v466, %v468
        %v484 = vsel %vm345, %v468, %v470
        %v485 = vsel %vm345, %v470, %v472
        %v486 = vsel %vm345, %v472, %v474
        %v487 = vsel %vm345, %v474, %v476
        %v488 = vsel %vm345, %v476, %v478
        %v489 = vsel %vm345, %v478, %v480
        %v490 = vsel %vm345, %v480, %v482
        %499 = vst [vmem:[#allocation2 + $0x100] sm:$0xff] %v483
        %500 = vst [vmem:[#allocation2 + $0x108] sm:$0xff] %v484
        %501 = vst [vmem:[#allocation2 + $0x110] sm:$0xff] %v485
        %502 = vst [vmem:[#allocation2 + $0x118] sm:$0xff] %v486
        %503 = vst [vmem:[#allocation2 + $0x120] sm:$0xff] %v487
        %504 = vst [vmem:[#allocation2 + $0x128] sm:$0xff] %v488
        %505 = vst [vmem:[#allocation2 + $0x130] sm:$0xff] %v489
        %506 = vst [vmem:[#allocation2 + $0x138] sm:$0xff] %v490
        %v507 = vld [vmem:[%s243 + $0x8] sm:$0xff]
        %v508 = vld [vmem:[%s243 + $0x10] sm:$0xff]
        %v509 = vld [vmem:[%s243 + $0x18] sm:$0xff]
        %v510 = vld [vmem:[%s243 + $0x20] sm:$0xff]
        %v511 = vld [vmem:[%s243 + $0x28] sm:$0xff]
        %v512 = vld [vmem:[%s243 + $0x30] sm:$0xff]
        %v513 = vld [vmem:[%s243 + $0x38] sm:$0xff]
        %v514 = vld [vmem:[%s243 + $0x40] sm:$0xff]
        %v515 = vld [vmem:[%s243 + $0x48] sm:$0xff]
        %525 = vrot.lane.b32.xlu0 %v507, 126
        %v526 = vpop.permute.xlu0 %525
        %527 = vrot.lane.b32.xlu0 %v508, 126
        %v528 = vpop.permute.xlu0 %527
        %529 = vrot.lane.b32.xlu0 %v509, 126
        %v530 = vpop.permute.xlu0 %529
        %531 = vrot.lane.b32.xlu0 %v510, 126
        %v532 = vpop.permute.xlu0 %531
        %533 = vrot.lane.b32.xlu0 %v511, 126
        %v534 = vpop.permute.xlu0 %533
        %535 = vrot.lane.b32.xlu0 %v512, 126
        %v536 = vpop.permute.xlu0 %535
        %537 = vrot.lane.b32.xlu0 %v513, 126
        %v538 = vpop.permute.xlu0 %537
        %539 = vrot.lane.b32.xlu0 %v514, 126
        %v540 = vpop.permute.xlu0 %539
        %541 = vrot.lane.b32.xlu0 %v515, 126
        %v542 = vpop.permute.xlu0 %541
        %v543 = vsel %vm406, %v526, %v528
        %v544 = vsel %vm406, %v528, %v530
        %v545 = vsel %vm406, %v530, %v532
        %v546 = vsel %vm406, %v532, %v534
        %v547 = vsel %vm406, %v534, %v536
        %v548 = vsel %vm406, %v536, %v538
        %v549 = vsel %vm406, %v538, %v540
        %v550 = vsel %vm406, %v540, %v542
        %559 = vst [vmem:[#allocation2 + $0x140] sm:$0xff] %v543
        %560 = vst [vmem:[#allocation2 + $0x148] sm:$0xff] %v544
        %561 = vst [vmem:[#allocation2 + $0x150] sm:$0xff] %v545
        %562 = vst [vmem:[#allocation2 + $0x158] sm:$0xff] %v546
        %563 = vst [vmem:[#allocation2 + $0x160] sm:$0xff] %v547
        %564 = vst [vmem:[#allocation2 + $0x168] sm:$0xff] %v548
        %565 = vst [vmem:[#allocation2 + $0x170] sm:$0xff] %v549
        %566 = vst [vmem:[#allocation2 + $0x178] sm:$0xff] %v550
        %v567 = vld [vmem:[%s243 + $0x10] sm:$0xff]
        %v568 = vld [vmem:[%s243 + $0x18] sm:$0xff]
        %v569 = vld [vmem:[%s243 + $0x20] sm:$0xff]
        %v570 = vld [vmem:[%s243 + $0x28] sm:$0xff]
        %v571 = vld [vmem:[%s243 + $0x30] sm:$0xff]
        %v572 = vld [vmem:[%s243 + $0x38] sm:$0xff]
        %v573 = vld [vmem:[%s243 + $0x40] sm:$0xff]
        %v574 = vld [vmem:[%s243 + $0x48] sm:$0xff]
        %575 = vst [vmem:[#allocation2 + $0x180] sm:$0xff] %v567
        %576 = vst [vmem:[#allocation2 + $0x188] sm:$0xff] %v568
        %577 = vst [vmem:[#allocation2 + $0x190] sm:$0xff] %v569
        %578 = vst [vmem:[#allocation2 + $0x198] sm:$0xff] %v570
        %579 = vst [vmem:[#allocation2 + $0x1a0] sm:$0xff] %v571
        %580 = vst [vmem:[#allocation2 + $0x1a8] sm:$0xff] %v572
        %581 = vst [vmem:[#allocation2 + $0x1b0] sm:$0xff] %v573
        %582 = vst [vmem:[#allocation2 + $0x1b8] sm:$0xff] %v574
        %v583 = vld [vmem:[%s243 + $0x10] sm:$0xff]
        %v584 = vld [vmem:[%s243 + $0x18] sm:$0xff]
        %v585 = vld [vmem:[%s243 + $0x20] sm:$0xff]
        %v586 = vld [vmem:[%s243 + $0x28] sm:$0xff]
        %v587 = vld [vmem:[%s243 + $0x30] sm:$0xff]
        %v588 = vld [vmem:[%s243 + $0x38] sm:$0xff]
        %v589 = vld [vmem:[%s243 + $0x40] sm:$0xff]
        %v590 = vld [vmem:[%s243 + $0x48] sm:$0xff]
        %v591 = vld [vmem:[%s243 + $0x50] sm:$0xff]
        %601 = vrot.lane.b32.xlu0 %v583, 127
        %v602 = vpop.permute.xlu0 %601
        %603 = vrot.lane.b32.xlu0 %v584, 127
        %v604 = vpop.permute.xlu0 %603
        %605 = vrot.lane.b32.xlu0 %v585, 127
        %v606 = vpop.permute.xlu0 %605
        %607 = vrot.lane.b32.xlu0 %v586, 127
        %v608 = vpop.permute.xlu0 %607
        %609 = vrot.lane.b32.xlu0 %v587, 127
        %v610 = vpop.permute.xlu0 %609
        %611 = vrot.lane.b32.xlu0 %v588, 127
        %v612 = vpop.permute.xlu0 %611
        %613 = vrot.lane.b32.xlu0 %v589, 127
        %v614 = vpop.permute.xlu0 %613
        %615 = vrot.lane.b32.xlu0 %v590, 127
        %v616 = vpop.permute.xlu0 %615
        %617 = vrot.lane.b32.xlu0 %v591, 127
        %v618 = vpop.permute.xlu0 %617
        %v619 = vsel %vm345, %v602, %v604
        %v620 = vsel %vm345, %v604, %v606
        %v621 = vsel %vm345, %v606, %v608
        %v622 = vsel %vm345, %v608, %v610
        %v623 = vsel %vm345, %v610, %v612
        %v624 = vsel %vm345, %v612, %v614
        %v625 = vsel %vm345, %v614, %v616
        %v626 = vsel %vm345, %v616, %v618
        %635 = vst [vmem:[#allocation2 + $0x1c0] sm:$0xff] %v619
        %636 = vst [vmem:[#allocation2 + $0x1c8] sm:$0xff] %v620
        %637 = vst [vmem:[#allocation2 + $0x1d0] sm:$0xff] %v621
        %638 = vst [vmem:[#allocation2 + $0x1d8] sm:$0xff] %v622
        %639 = vst [vmem:[#allocation2 + $0x1e0] sm:$0xff] %v623
        %640 = vst [vmem:[#allocation2 + $0x1e8] sm:$0xff] %v624
        %641 = vst [vmem:[#allocation2 + $0x1f0] sm:$0xff] %v625
        %642 = vst [vmem:[#allocation2 + $0x1f8] sm:$0xff] %v626
        %v643 = vld [vmem:[%s243 + $0x10] sm:$0xff]
        %v644 = vld [vmem:[%s243 + $0x18] sm:$0xff]
        %v645 = vld [vmem:[%s243 + $0x20] sm:$0xff]
        %v646 = vld [vmem:[%s243 + $0x28] sm:$0xff]
        %v647 = vld [vmem:[%s243 + $0x30] sm:$0xff]
        %v648 = vld [vmem:[%s243 + $0x38] sm:$0xff]
        %v649 = vld [vmem:[%s243 + $0x40] sm:$0xff]
        %v650 = vld [vmem:[%s243 + $0x48] sm:$0xff]
        %v651 = vld [vmem:[%s243 + $0x50] sm:$0xff]
        %661 = vrot.lane.b32.xlu0 %v643, 126
        %v662 = vpop.permute.xlu0 %661
        %663 = vrot.lane.b32.xlu0 %v644, 126
        %v664 = vpop.permute.xlu0 %663
        %665 = vrot.lane.b32.xlu0 %v645, 126
        %v666 = vpop.permute.xlu0 %665
        %667 = vrot.lane.b32.xlu0 %v646, 126
        %v668 = vpop.permute.xlu0 %667
        %669 = vrot.lane.b32.xlu0 %v647, 126
        %v670 = vpop.permute.xlu0 %669
        %671 = vrot.lane.b32.xlu0 %v648, 126
        %v672 = vpop.permute.xlu0 %671
        %673 = vrot.lane.b32.xlu0 %v649, 126
        %v674 = vpop.permute.xlu0 %673
        %675 = vrot.lane.b32.xlu0 %v650, 126
        %v676 = vpop.permute.xlu0 %675
        %677 = vrot.lane.b32.xlu0 %v651, 126
        %v678 = vpop.permute.xlu0 %677
        %v679 = vsel %vm406, %v662, %v664
        %v680 = vsel %vm406, %v664, %v666
        %v681 = vsel %vm406, %v666, %v668
        %v682 = vsel %vm406, %v668, %v670
        %v683 = vsel %vm406, %v670, %v672
        %v684 = vsel %vm406, %v672, %v674
        %v685 = vsel %vm406, %v674, %v676
        %v686 = vsel %vm406, %v676, %v678
        %695 = vst [vmem:[#allocation2 + $0x200] sm:$0xff] %v679
        %696 = vst [vmem:[#allocation2 + $0x208] sm:$0xff] %v680
        %697 = vst [vmem:[#allocation2 + $0x210] sm:$0xff] %v681
        %698 = vst [vmem:[#allocation2 + $0x218] sm:$0xff] %v682
        %699 = vst [vmem:[#allocation2 + $0x220] sm:$0xff] %v683
        %700 = vst [vmem:[#allocation2 + $0x228] sm:$0xff] %v684
        %701 = vst [vmem:[#allocation2 + $0x230] sm:$0xff] %v685
        %702 = vst [vmem:[#allocation2 + $0x238] sm:$0xff] %v686
        %v703 = vld [vmem:[%s283] sm:$0xff]
        %v704 = vld [vmem:[#allocation2] sm:$0xff]
        %v705 = vld [vmem:[#allocation2 + $0x8] sm:$0xff]
        %v706 = vld [vmem:[#allocation2 + $0x10] sm:$0xff]
        %v707 = vld [vmem:[#allocation2 + $0x18] sm:$0xff]
        %v708 = vld [vmem:[#allocation2 + $0x20] sm:$0xff]
        %v709 = vld [vmem:[#allocation2 + $0x28] sm:$0xff]
        %v710 = vld [vmem:[#allocation2 + $0x30] sm:$0xff]
        %v711 = vld [vmem:[#allocation2 + $0x38] sm:$0xff]
        %v712 = vld [vmem:[#allocation2 + $0x40] sm:$0xff]
        %v713 = vld [vmem:[#allocation2 + $0x48] sm:$0xff]
        %v714 = vld [vmem:[#allocation2 + $0x50] sm:$0xff]
        %v715 = vld [vmem:[#allocation2 + $0x58] sm:$0xff]
        %v716 = vld [vmem:[#allocation2 + $0x60] sm:$0xff]
        %v717 = vld [vmem:[#allocation2 + $0x68] sm:$0xff]
        %v718 = vld [vmem:[#allocation2 + $0x70] sm:$0xff]
        %v719 = vld [vmem:[#allocation2 + $0x78] sm:$0xff]
        %v720 = vld [vmem:[#allocation2 + $0x80] sm:$0xff]
        %v721 = vld [vmem:[#allocation2 + $0x88] sm:$0xff]
        %v722 = vld [vmem:[#allocation2 + $0x90] sm:$0xff]
        %v723 = vld [vmem:[#allocation2 + $0x98] sm:$0xff]
        %v724 = vld [vmem:[#allocation2 + $0xa0] sm:$0xff]
        %v725 = vld [vmem:[#allocation2 + $0xa8] sm:$0xff]
        %v726 = vld [vmem:[#allocation2 + $0xb0] sm:$0xff]
        %v727 = vld [vmem:[#allocation2 + $0xb8] sm:$0xff]
        %v728 = vld [vmem:[#allocation2 + $0xc0] sm:$0xff]
        %v729 = vld [vmem:[#allocation2 + $0xc8] sm:$0xff]
        %v730 = vld [vmem:[#allocation2 + $0xd0] sm:$0xff]
        %v731 = vld [vmem:[#allocation2 + $0xd8] sm:$0xff]
        %v732 = vld [vmem:[#allocation2 + $0xe0] sm:$0xff]
        %v733 = vld [vmem:[#allocation2 + $0xe8] sm:$0xff]
        %v734 = vld [vmem:[#allocation2 + $0xf0] sm:$0xff]
        %v735 = vld [vmem:[#allocation2 + $0xf8] sm:$0xff]
        %v736 = vld [vmem:[#allocation2 + $0x100] sm:$0xff]
        %v737 = vld [vmem:[#allocation2 + $0x108] sm:$0xff]
        %v738 = vld [vmem:[#allocation2 + $0x110] sm:$0xff]
        %v739 = vld [vmem:[#allocation2 + $0x118] sm:$0xff]
        %v740 = vld [vmem:[#allocation2 + $0x120] sm:$0xff]
        %v741 = vld [vmem:[#allocation2 + $0x128] sm:$0xff]
        %v742 = vld [vmem:[#allocation2 + $0x130] sm:$0xff]
        %v743 = vld [vmem:[#allocation2 + $0x138] sm:$0xff]
        %v744 = vld [vmem:[#allocation2 + $0x140] sm:$0xff]
        %v745 = vld [vmem:[#allocation2 + $0x148] sm:$0xff]
        %v746 = vld [vmem:[#allocation2 + $0x150] sm:$0xff]
        %v747 = vld [vmem:[#allocation2 + $0x158] sm:$0xff]
        %v748 = vld [vmem:[#allocation2 + $0x160] sm:$0xff]
        %v749 = vld [vmem:[#allocation2 + $0x168] sm:$0xff]
        %v750 = vld [vmem:[#allocation2 + $0x170] sm:$0xff]
        %v751 = vld [vmem:[#allocation2 + $0x178] sm:$0xff]
        %v752 = vld [vmem:[#allocation2 + $0x180] sm:$0xff]
        %v753 = vld [vmem:[#allocation2 + $0x188] sm:$0xff]
        %v754 = vld [vmem:[#allocation2 + $0x190] sm:$0xff]
        %v755 = vld [vmem:[#allocation2 + $0x198] sm:$0xff]
        %v756 = vld [vmem:[#allocation2 + $0x1a0] sm:$0xff]
        %v757 = vld [vmem:[#allocation2 + $0x1a8] sm:$0xff]
        %v758 = vld [vmem:[#allocation2 + $0x1b0] sm:$0xff]
        %v759 = vld [vmem:[#allocation2 + $0x1b8] sm:$0xff]
        %v760 = vld [vmem:[#allocation2 + $0x1c0] sm:$0xff]
        %v761 = vld [vmem:[#allocation2 + $0x1c8] sm:$0xff]
        %v762 = vld [vmem:[#allocation2 + $0x1d0] sm:$0xff]
        %v763 = vld [vmem:[#allocation2 + $0x1d8] sm:$0xff]
        %v764 = vld [vmem:[#allocation2 + $0x1e0] sm:$0xff]
        %v765 = vld [vmem:[#allocation2 + $0x1e8] sm:$0xff]
        %v766 = vld [vmem:[#allocation2 + $0x1f0] sm:$0xff]
        %v767 = vld [vmem:[#allocation2 + $0x1f8] sm:$0xff]
        %v768 = vld [vmem:[#allocation2 + $0x200] sm:$0xff]
        %v769 = vld [vmem:[#allocation2 + $0x208] sm:$0xff]
        %v770 = vld [vmem:[#allocation2 + $0x210] sm:$0xff]
        %v771 = vld [vmem:[#allocation2 + $0x218] sm:$0xff]
        %v772 = vld [vmem:[#allocation2 + $0x220] sm:$0xff]
        %v773 = vld [vmem:[#allocation2 + $0x228] sm:$0xff]
        %v774 = vld [vmem:[#allocation2 + $0x230] sm:$0xff]
        %v775 = vld [vmem:[#allocation2 + $0x238] sm:$0xff]
        %vm776 = vcmask 588800
        %v778 = vsel %vm776, %v703, 0
        %780 = vmatprep.subr.mxu0 %v705
        %781 = vmatpush1.msra.mxu0 %v704
        %782 = vmatprep.subr.mxu0 %v713
        %783 = vmatpush1.msra.mxu0 %v712
        %784 = vmatprep.subr.mxu0 %v721
        %785 = vmatpush1.msra.mxu0 %v720
        %786 = vmatprep.subr.mxu0 %v729
        %787 = vmatpush1.msra.mxu0 %v728
        %788 = vmatprep.subr.mxu0 %v737
        %789 = vmatpush1.msra.mxu0 %v736
        %790 = vmatprep.subr.mxu0 %v745
        %791 = vmatpush1.msra.mxu0 %v744
        %792 = vmatprep.subr.mxu0 %v753
        %793 = vmatpush1.msra.mxu0 %v752
        %794 = vmatprep.subr.mxu0 %v761
        %795 = vmatpush1.msra.mxu0 %v760
        %796 = vmatprep.subr.mxu0 %v769
        %797 = vmatpush1.msra.mxu0 %v768
        %798 = vmatprep.subr.mxu0 0.0
        %799 = vmatpush1.msra.mxu0 0.0
        %800 = vmatprep.subr.mxu0 0.0
        %801 = vmatpush1.msra.mxu0 0.0
        %802 = vmatprep.subr.mxu0 0.0
        %803 = vmatpush1.msra.mxu0 0.0
        %804 = vmatprep.subr.mxu0 0.0
        %805 = vmatpush1.msra.mxu0 0.0
        %806 = vmatprep.subr.mxu0 0.0
        %807 = vmatpush1.msra.mxu0 0.0
        %808 = vmatprep.subr.mxu0 0.0
        %809 = vmatpush1.msra.mxu0 0.0
        %810 = vmatprep.subr.mxu0 0.0
        %811 = vmatpush1.msra.mxu0 0.0
        %812 = vmatprep.subr.mxu0 0.0
        %813 = vmatpush1.msra.mxu0 0.0
        %814 = vmatprep.subr.mxu0 0.0
        %815 = vmatpush1.msra.mxu0 0.0
        %816 = vmatprep.subr.mxu0 0.0
        %817 = vmatpush1.msra.mxu0 0.0
        %818 = vmatprep.subr.mxu0 0.0
        %819 = vmatpush1.msra.mxu0 0.0
        %820 = vmatprep.subr.mxu0 0.0
        %821 = vmatpush1.msra.mxu0 0.0
        %822 = vmatprep.subr.mxu0 0.0
        %823 = vmatpush1.msra.mxu0 0.0
        %824 = vmatprep.subr.mxu0 0.0
        %825 = vmatpush1.msra.mxu0 0.0
        %826 = vmatprep.subr.mxu0 0.0
        %827 = vmatpush1.msra.mxu0 0.0
        %828 = vmatprep.subr.mxu0 0.0
        %829 = vmatpush1.msra.mxu0 0.0
        %830 = vmatprep.subr.mxu0 0.0
        %831 = vmatpush1.msra.mxu0 0.0
        %832 = vmatprep.subr.mxu0 0.0
        %833 = vmatpush1.msra.mxu0 0.0
        %834 = vmatprep.subr.mxu0 0.0
        %835 = vmatpush1.msra.mxu0 0.0
        %836 = vmatprep.subr.mxu0 0.0
        %837 = vmatpush1.msra.mxu0 0.0
        %838 = vmatprep.subr.mxu0 0.0
        %839 = vmatpush1.msra.mxu0 0.0
        %840 = vmatprep.subr.mxu0 0.0
        %841 = vmatpush1.msra.mxu0 0.0
        %842 = vmatprep.subr.mxu0 0.0
        %843 = vmatpush1.msra.mxu0 0.0
        %844 = vmatprep.mubr.f32.mxu0 0.0
        %845 = vmatmul.mubr.f32.gmra.mrb[0].mxu0 %v778
        %v846 = vpop.f32.mrb[0].mxu0
        %v847 = vadd.f32 0.0, %v846
        %v848 = vpop.f32.mrb[0].mxu0
        %v849 = vadd.f32 0.0, %v848
        %850 = vdwg.mxu0
        %851 = vmatprep.subr.mxu0 %v707
        %852 = vmatpush1.msra.mxu0 %v706
        %853 = vmatprep.subr.mxu0 %v715
        %854 = vmatpush1.msra.mxu0 %v714
        %855 = vmatprep.subr.mxu0 %v723
        %856 = vmatpush1.msra.mxu0 %v722
        %857 = vmatprep.subr.mxu0 %v731
        %858 = vmatpush1.msra.mxu0 %v730
        %859 = vmatprep.subr.mxu0 %v739
        %860 = vmatpush1.msra.mxu0 %v738
        %861 = vmatprep.subr.mxu0 %v747
        %862 = vmatpush1.msra.mxu0 %v746
        %863 = vmatprep.subr.mxu0 %v755
        %864 = vmatpush1.msra.mxu0 %v754
        %865 = vmatprep.subr.mxu0 %v763
        %866 = vmatpush1.msra.mxu0 %v762
        %867 = vmatprep.subr.mxu0 %v771
        %868 = vmatpush1.msra.mxu0 %v770
        %869 = vmatprep.subr.mxu0 0.0
        %870 = vmatpush1.msra.mxu0 0.0
        %871 = vmatprep.subr.mxu0 0.0
        %872 = vmatpush1.msra.mxu0 0.0
        %873 = vmatprep.subr.mxu0 0.0
        %874 = vmatpush1.msra.mxu0 0.0
        %875 = vmatprep.subr.mxu0 0.0
        %876 = vmatpush1.msra.mxu0 0.0
        %877 = vmatprep.subr.mxu0 0.0
        %878 = vmatpush1.msra.mxu0 0.0
        %879 = vmatprep.subr.mxu0 0.0
        %880 = vmatpush1.msra.mxu0 0.0
        %881 = vmatprep.subr.mxu0 0.0
        %882 = vmatpush1.msra.mxu0 0.0
        %883 = vmatprep.subr.mxu0 0.0
        %884 = vmatpush1.msra.mxu0 0.0
        %885 = vmatprep.subr.mxu0 0.0
        %886 = vmatpush1.msra.mxu0 0.0
        %887 = vmatprep.subr.mxu0 0.0
        %888 = vmatpush1.msra.mxu0 0.0
        %889 = vmatprep.subr.mxu0 0.0
        %890 = vmatpush1.msra.mxu0 0.0
        %891 = vmatprep.subr.mxu0 0.0
        %892 = vmatpush1.msra.mxu0 0.0
        %893 = vmatprep.subr.mxu0 0.0
        %894 = vmatpush1.msra.mxu0 0.0
        %895 = vmatprep.subr.mxu0 0.0
        %896 = vmatpush1.msra.mxu0 0.0
        %897 = vmatprep.subr.mxu0 0.0
        %898 = vmatpush1.msra.mxu0 0.0
        %899 = vmatprep.subr.mxu0 0.0
        %900 = vmatpush1.msra.mxu0 0.0
        %901 = vmatprep.subr.mxu0 0.0
        %902 = vmatpush1.msra.mxu0 0.0
        %903 = vmatprep.subr.mxu0 0.0
        %904 = vmatpush1.msra.mxu0 0.0
        %905 = vmatprep.subr.mxu0 0.0
        %906 = vmatpush1.msra.mxu0 0.0
        %907 = vmatprep.subr.mxu0 0.0
        %908 = vmatpush1.msra.mxu0 0.0
        %909 = vmatprep.subr.mxu0 0.0
        %910 = vmatpush1.msra.mxu0 0.0
        %911 = vmatprep.subr.mxu0 0.0
        %912 = vmatpush1.msra.mxu0 0.0
        %913 = vmatprep.subr.mxu0 0.0
        %914 = vmatpush1.msra.mxu0 0.0
        %915 = vmatprep.mubr.f32.mxu0 0.0
        %916 = vmatmul.mubr.f32.gmra.mrb[0].mxu0 %v778
        %v917 = vpop.f32.mrb[0].mxu0
        %v918 = vadd.f32 0.0, %v917
        %v919 = vpop.f32.mrb[0].mxu0
        %v920 = vadd.f32 0.0, %v919
        %921 = vdwg.mxu0
        %922 = vmatprep.subr.mxu0 %v709
        %923 = vmatpush1.msra.mxu0 %v708
        %924 = vmatprep.subr.mxu0 %v717
        %925 = vmatpush1.msra.mxu0 %v716
        %926 = vmatprep.subr.mxu0 %v725
        %927 = vmatpush1.msra.mxu0 %v724
        %928 = vmatprep.subr.mxu0 %v733
        %929 = vmatpush1.msra.mxu0 %v732
        %930 = vmatprep.subr.mxu0 %v741
        %931 = vmatpush1.msra.mxu0 %v740
        %932 = vmatprep.subr.mxu0 %v749
        %933 = vmatpush1.msra.mxu0 %v748
        %934 = vmatprep.subr.mxu0 %v757
        %935 = vmatpush1.msra.mxu0 %v756
        %936 = vmatprep.subr.mxu0 %v765
        %937 = vmatpush1.msra.mxu0 %v764
        %938 = vmatprep.subr.mxu0 %v773
        %939 = vmatpush1.msra.mxu0 %v772
        %940 = vmatprep.subr.mxu0 0.0
        %941 = vmatpush1.msra.mxu0 0.0
        %942 = vmatprep.subr.mxu0 0.0
        %943 = vmatpush1.msra.mxu0 0.0
        %944 = vmatprep.subr.mxu0 0.0
        %945 = vmatpush1.msra.mxu0 0.0
        %946 = vmatprep.subr.mxu0 0.0
        %947 = vmatpush1.msra.mxu0 0.0
        %948 = vmatprep.subr.mxu0 0.0
        %949 = vmatpush1.msra.mxu0 0.0
        %950 = vmatprep.subr.mxu0 0.0
        %951 = vmatpush1.msra.mxu0 0.0
        %952 = vmatprep.subr.mxu0 0.0
        %953 = vmatpush1.msra.mxu0 0.0
        %954 = vmatprep.subr.mxu0 0.0
        %955 = vmatpush1.msra.mxu0 0.0
        %956 = vmatprep.subr.mxu0 0.0
        %957 = vmatpush1.msra.mxu0 0.0
        %958 = vmatprep.subr.mxu0 0.0
        %959 = vmatpush1.msra.mxu0 0.0
        %960 = vmatprep.subr.mxu0 0.0
        %961 = vmatpush1.msra.mxu0 0.0
        %962 = vmatprep.subr.mxu0 0.0
        %963 = vmatpush1.msra.mxu0 0.0
        %964 = vmatprep.subr.mxu0 0.0
        %965 = vmatpush1.msra.mxu0 0.0
        %966 = vmatprep.subr.mxu0 0.0
        %967 = vmatpush1.msra.mxu0 0.0
        %968 = vmatprep.subr.mxu0 0.0
        %969 = vmatpush1.msra.mxu0 0.0
        %970 = vmatprep.subr.mxu0 0.0
        %971 = vmatpush1.msra.mxu0 0.0
        %972 = vmatprep.subr.mxu0 0.0
        %973 = vmatpush1.msra.mxu0 0.0
        %974 = vmatprep.subr.mxu0 0.0
        %975 = vmatpush1.msra.mxu0 0.0
        %976 = vmatprep.subr.mxu0 0.0
        %977 = vmatpush1.msra.mxu0 0.0
        %978 = vmatprep.subr.mxu0 0.0
        %979 = vmatpush1.msra.mxu0 0.0
        %980 = vmatprep.subr.mxu0 0.0
        %981 = vmatpush1.msra.mxu0 0.0
        %982 = vmatprep.subr.mxu0 0.0
        %983 = vmatpush1.msra.mxu0 0.0
        %984 = vmatprep.subr.mxu0 0.0
        %985 = vmatpush1.msra.mxu0 0.0
        %986 = vmatprep.mubr.f32.mxu0 0.0
        %987 = vmatmul.mubr.f32.gmra.mrb[0].mxu0 %v778
        %v988 = vpop.f32.mrb[0].mxu0
        %v989 = vadd.f32 0.0, %v988
        %v990 = vpop.f32.mrb[0].mxu0
        %v991 = vadd.f32 0.0, %v990
        %992 = vdwg.mxu0
        %993 = vmatprep.subr.mxu0 %v711
        %994 = vmatpush1.msra.mxu0 %v710
        %995 = vmatprep.subr.mxu0 %v719
        %996 = vmatpush1.msra.mxu0 %v718
        %997 = vmatprep.subr.mxu0 %v727
        %998 = vmatpush1.msra.mxu0 %v726
        %999 = vmatprep.subr.mxu0 %v735
        %1000 = vmatpush1.msra.mxu0 %v734
        %1001 = vmatprep.subr.mxu0 %v743
        %1002 = vmatpush1.msra.mxu0 %v742
        %1003 = vmatprep.subr.mxu0 %v751
        %1004 = vmatpush1.msra.mxu0 %v750
        %1005 = vmatprep.subr.mxu0 %v759
        %1006 = vmatpush1.msra.mxu0 %v758
        %1007 = vmatprep.subr.mxu0 %v767
        %1008 = vmatpush1.msra.mxu0 %v766
        %1009 = vmatprep.subr.mxu0 %v775
        %1010 = vmatpush1.msra.mxu0 %v774
        %1011 = vmatprep.subr.mxu0 0.0
        %1012 = vmatpush1.msra.mxu0 0.0
        %1013 = vmatprep.subr.mxu0 0.0
        %1014 = vmatpush1.msra.mxu0 0.0
        %1015 = vmatprep.subr.mxu0 0.0
        %1016 = vmatpush1.msra.mxu0 0.0
        %1017 = vmatprep.subr.mxu0 0.0
        %1018 = vmatpush1.msra.mxu0 0.0
        %1019 = vmatprep.subr.mxu0 0.0
        %1020 = vmatpush1.msra.mxu0 0.0
        %1021 = vmatprep.subr.mxu0 0.0
        %1022 = vmatpush1.msra.mxu0 0.0
        %1023 = vmatprep.subr.mxu0 0.0
        %1024 = vmatpush1.msra.mxu0 0.0
        %1025 = vmatprep.subr.mxu0 0.0
        %1026 = vmatpush1.msra.mxu0 0.0
        %1027 = vmatprep.subr.mxu0 0.0
        %1028 = vmatpush1.msra.mxu0 0.0
        %1029 = vmatprep.subr.mxu0 0.0
        %1030 = vmatpush1.msra.mxu0 0.0
        %1031 = vmatprep.subr.mxu0 0.0
        %1032 = vmatpush1.msra.mxu0 0.0
        %1033 = vmatprep.subr.mxu0 0.0
        %1034 = vmatpush1.msra.mxu0 0.0
        %1035 = vmatprep.subr.mxu0 0.0
        %1036 = vmatpush1.msra.mxu0 0.0
        %1037 = vmatprep.subr.mxu0 0.0
        %1038 = vmatpush1.msra.mxu0 0.0
        %1039 = vmatprep.subr.mxu0 0.0
        %1040 = vmatpush1.msra.mxu0 0.0
        %1041 = vmatprep.subr.mxu0 0.0
        %1042 = vmatpush1.msra.mxu0 0.0
        %1043 = vmatprep.subr.mxu0 0.0
        %1044 = vmatpush1.msra.mxu0 0.0
        %1045 = vmatprep.subr.mxu0 0.0
        %1046 = vmatpush1.msra.mxu0 0.0
        %1047 = vmatprep.subr.mxu0 0.0
        %1048 = vmatpush1.msra.mxu0 0.0
        %1049 = vmatprep.subr.mxu0 0.0
        %1050 = vmatpush1.msra.mxu0 0.0
        %1051 = vmatprep.subr.mxu0 0.0
        %1052 = vmatpush1.msra.mxu0 0.0
        %1053 = vmatprep.subr.mxu0 0.0
        %1054 = vmatpush1.msra.mxu0 0.0
        %1055 = vmatprep.subr.mxu0 0.0
        %1056 = vmatpush1.msra.mxu0 0.0
        %1057 = vmatprep.mubr.f32.mxu0 0.0
        %1058 = vmatmul.mubr.f32.gmra.mrb[0].mxu0 %v778
        %v1059 = vpop.f32.mrb[0].mxu0
        %v1060 = vadd.f32 0.0, %v1059
        %v1061 = vpop.f32.mrb[0].mxu0
        %v1062 = vadd.f32 0.0, %v1061
        %1063 = vdwg.mxu0
        %v1064 = vld [vmem:[%s287] sm:$0xff]
        %1066 = vset.pattern.permute.xlu0 0
        %1067 = vperm.xlu0 %1066, %v1064
        %v1068 = vpop.permute.xlu0 %1067
        %v1070 = vmul.f32 %v847, %v1068
        %v1071 = vmul.f32 %v849, %v1068
        %v1072 = vmul.f32 %v918, %v1068
        %v1073 = vmul.f32 %v920, %v1068
        %v1074 = vmul.f32 %v989, %v1068
        %v1075 = vmul.f32 %v991, %v1068
        %v1076 = vmul.f32 %v1060, %v1068
        %v1077 = vmul.f32 %v1062, %v1068
        %v1078 = vld [vmem:[%s291] sm:$0xff]
        %1080 = vset.pattern.permute.xlu0 0
        %1081 = vperm.xlu0 %1080, %v1078
        %v1082 = vpop.permute.xlu0 %1081
        %v1084 = vadd.f32 %v1070, %v1082
        %v1085 = vadd.f32 %v1071, %v1082
        %v1086 = vadd.f32 %v1072, %v1082
        %v1087 = vadd.f32 %v1073, %v1082
        %v1088 = vadd.f32 %v1074, %v1082
        %v1089 = vadd.f32 %v1075, %v1082
        %v1090 = vadd.f32 %v1076, %v1082
        %v1091 = vadd.f32 %v1077, %v1082
        %1092 = vst [vmem:[%s279] sm:$0xff] %v1084
        %1093 = vst [vmem:[%s279 + $0x8] sm:$0xff] %v1085
        %1094 = vst [vmem:[%s279 + $0x10] sm:$0xff] %v1086
        %1095 = vst [vmem:[%s279 + $0x18] sm:$0xff] %v1087
        %1096 = vst [vmem:[%s279 + $0x20] sm:$0xff] %v1088
        %1097 = vst [vmem:[%s279 + $0x28] sm:$0xff] %v1089
        %1098 = vst [vmem:[%s279 + $0x30] sm:$0xff] %v1090
        %1099 = vst [vmem:[%s279 + $0x38] sm:$0xff] %v1091
        %s1100 = sand.u32 %s158, 1
        %s1101 = scalar_lea.sflag [#allocation5], %s1100
        %s1102 = sand.u32 %s158, 1
        %s1103 = smul.addr %s1102, 64
        %s1104 = scalar_lea.vmem [#allocation6], %s1103
        // Predicated region
        $region41: #{tpu_custom_call.1} parent=35 // pred_check
          %p1105 = pneg %p168
        $region42: #{tpu_custom_call.1} parent=35 // pred_check_branch
          %1107 = sbr.rel (%p1105) target = $region44
        $region43: #{tpu_custom_call.1} parent=35 // pred_region
          %s1108 = smul.u32 8, %s27
          %s1110 = ssub.s32 1024, 1024
          %1111 = vsyncadd %s1101, %s1110
          %s1112 = smul.addr %s28, 16
          %s1113 = sadd.s32 %s1108, %s1112
          %s1114 = smul.addr %s26, 16
          %s1115 = sadd.s32 %s1113, %s1114
          %s1116 = smul.addr %s1115, 128
          %s1117 = scalar_lea.hbm %s4, %s1116
          %s1119 = sshll.u32 %s1104, 4
          %s1120 = int_to_ptr.vmem [resolvable:$true] %s1119
          %1122 = dma.vmem_to_hbm [thread:$0]  %s1120, 1024, %s1117, %s1101
        $region44: #{tpu_custom_call.1} parent=35 // pred_fallthru
          _
      $region36: #{tpu_custom_call.1} parent=5 // pred_fallthru
        _
      %p1123 = scmp.le.s32.totalorder 2, %s16
      // Predicated region
      $region45: #{tpu_custom_call.1} parent=5 // pred_check
        %p1124 = pneg %p1123
      $region46: #{tpu_custom_call.1} parent=5 // pred_check_branch
        %1126 = sbr.rel (%p1124) target = $region48
      $region47: #{tpu_custom_call.1} parent=5 // pred_region
        %s1127 = ssub.s32 %s16, 2
        // Predicated region
        $region49: #{tpu_custom_call.1} parent=47 // pred_check
          %p1128 = pneg %p174
        $region50: #{tpu_custom_call.1} parent=47 // pred_check_branch
          %1130 = sbr.rel (%p1128) target = $region52
        $region51: #{tpu_custom_call.1} parent=47 // pred_region
          %s1131 = sand.u32 %s159, 1
          %s1132 = scalar_lea.sflag [#allocation5], %s1131
          %s1133 = sand.u32 %s159, 1
          %s1134 = smul.addr %s1133, 64
          %s1135 = scalar_lea.vmem [#allocation6], %s1134
          %1136 = dma.done %s1132, 1024
        $region52: #{tpu_custom_call.1} parent=47 // pred_fallthru
          _
      $region48: #{tpu_custom_call.1} parent=5 // pred_fallthru
        _
    $region6: #{tpu_custom_call.1} parent=1 // loop_footer
      %s20 = sadd.s32 1, %s16
    $region7: #{tpu_custom_call.1} parent=1 // loop_footer_branch
      %15 = sbr.rel target = $region3
    $region8: #{tpu_custom_call.1} parent=1 // loop_exit
      _
    %1137 = vsyncpa [#allocation4], 1
    %s1138 = scalar_lea.sflag [#allocation4], 1
    %1139 = vsyncpa %s1138, 1
    %1140 = vsyncpa [#allocation5], 1
    %s1141 = scalar_lea.sflag [#allocation5], 1
    %1142 = vsyncpa %s1141, 1

</llo_original>
